<compile_context>
chip_gen: v7x
topology: tpu7x:2x2x1
jax: 0.10.0
libtpu: 0.0.40
codegen_flags: <defaults>
</compile_context>

<pallas_src>
import functools

import jax
import jax.numpy as jnp
from jax.experimental import pallas as pl
from jax.experimental.pallas import tpu as pltpu

ALPHA = 0.05
EPS = 1e-5


def _round_up(x, m):
    return ((x + m - 1) // m) * m


def _sublane(dtype):
    # minimum second-minor tile granularity per dtype width
    return {4: 8, 2: 16, 1: 32}.get(jnp.dtype(dtype).itemsize, 8)


def _vmem_budget():
    """(big_vmem, scoped_vmem_cap_bytes) based on the local TPU generation."""
    try:
        kind = jax.devices()[0].device_kind.lower()
    except Exception:
        kind = ""
    big = any(tag in kind for tag in ("v4", "v5", "v6"))   # 128 MiB VMEM parts
    return big, (96 if big else 48) * 1024 * 1024          # stay under v7x's 64 MiB


def _bce_weight_kernel(pred_ref, tgt_ref, out_ref, acc_ref, *, alpha, tb, td):
    j = pl.program_id(2)                    # position along the (inner) reduction axis

    @pl.when(j == 0)
    def _():
        acc_ref[...] = jnp.zeros_like(acc_ref)

    p = pred_ref[...].astype(jnp.float32)
    t = tgt_ref[...].astype(jnp.float32)

    # -( (1-a)*t*log(p+eps) + a*(1-t)*log(1-p+eps) ) with the outer negate
    # folded into constant coefficients (saves one VALU op per vreg).
    c1 = jnp.float32(alpha - 1.0)
    c2 = jnp.float32(-alpha)
    loss = c1 * (t * jnp.log(p + EPS)) + c2 * ((1.0 - t) * jnp.log(1.0 - p + EPS))

    # Fold the (tb, td) block loss down to (8, td): pure-VPU adds of whole
    # (8,128) row groups (static slices never cross a tile boundary), then a
    # single accumulator read-modify-write per grid step.
    part = loss[0:8, :]
    for g in range(1, tb // 8):
        part = part + loss[8 * g:8 * (g + 1), :]
    acc_ref[...] += part

    @pl.when(j == pl.num_programs(2) - 1)
    def _():
        # One full reduce per output slab; broadcast the partial sum into the
        # (8, 128) output slab for this (batch tile, chunk).
        s = jnp.sum(acc_ref[...], keepdims=True)          # (1, 1)
        out_ref[0, 0] = jnp.broadcast_to(s, (8, 128))


def bce_with_weight(predict, target, alpha=ALPHA, block_bytes=None):
    """Pallas TPU implementation of BCE_WITH_WEIGHT.forward (reduction='mean')."""
    assert predict.shape == target.shape
    assert predict.ndim == 2
    B, D = predict.shape

    sub = max(_sublane(predict.dtype), _sublane(target.dtype))

    big_vmem, vmem_cap = _vmem_budget()
    if block_bytes is None:
        block_bytes = (8 if big_vmem else 4) * 1024 * 1024
    elems = max(block_bytes // 4, sub * 128)          # block sized as-if f32

    # ---- feature (lane) tile first: as large as possible.
    Dp128 = _round_up(D, 128)
    td_cap = max(128, ((elems // sub) // 128) * 128)
    td = min(Dp128, td_cap)
    nd = pl.cdiv(Dp128, td)
    td = _round_up(pl.cdiv(Dp128, nd), 128)           # balance -> minimal padding
    Dp = nd * td

    # ---- batch (sublane) tile with the remaining per-block budget.
    Bsub = _round_up(B, sub)
    tb_cap = max(sub, ((elems // td) // sub) * sub)
    tb = min(Bsub, tb_cap)
    nb = pl.cdiv(Bsub, tb)
    tb = _round_up(pl.cdiv(Bsub, nb), sub)            # balance -> minimal padding
    Bp = nb * tb

    # ---- v7x: with a single batch tile, split the reduction axis into 2
    # parallel outer chunks so both TensorCores get work (no-op on 1-core chips).
    ns = 2 if (nb < 2 and nd >= 2 and nd % 2 == 0) else 1
    ndi = nd // ns

    # ---- loss-neutral padding: target=0, predict=EPS  =>  padded loss == 0,
    # so no in-kernel mask is needed.
    if (Bp != B) or (Dp != D):
        pad = ((0, Bp - B), (0, Dp - D))
        predict = jnp.pad(predict, pad, constant_values=EPS)
        target = jnp.pad(target, pad, constant_values=0.0)

    kernel = functools.partial(_bce_weight_kernel,
                               alpha=float(alpha), tb=tb, td=td)

    # 2 pipeline buffers x both inputs + f32 temporaries + accumulator + slack.
    blk_in = tb * td * (jnp.dtype(predict.dtype).itemsize
                        + jnp.dtype(target.dtype).itemsize)
    vmem_need = 2 * blk_in + tb * td * 4 + 8 * td * 4 + (1 << 20)
    vmem_limit = int(min(vmem_cap, max(32 << 20, vmem_need)))

    partials = pl.pallas_call(
        kernel,
        out_shape=jax.ShapeDtypeStruct((nb, ns, 8, 128), jnp.float32),
        grid_spec=pltpu.PrefetchScalarGridSpec(
            num_scalar_prefetch=0,
            grid=(nb, ns, ndi),
            in_specs=[
                pl.BlockSpec((tb, td), lambda i, c, j: (i, c * ndi + j)),
                pl.BlockSpec((tb, td), lambda i, c, j: (i, c * ndi + j)),
            ],
            out_specs=pl.BlockSpec((1, 1, 8, 128), lambda i, c, j: (i, c, 0, 0)),
            scratch_shapes=[pltpu.VMEM((8, td), jnp.float32)],
        ),
        compiler_params=pltpu.CompilerParams(
            # batch tiles and reduction chunks are independent partial sums
            # -> shardable across TensorCores; the inner feature axis is the
            # sequential reduction.
            dimension_semantics=("parallel", "parallel", "arbitrary"),
            vmem_limit_bytes=vmem_limit,
        ),
    )(predict, target)

    # Each (batch tile, chunk) broadcast its partial sum over an (8, 128)
    # slab; pick one element each and finish sum(axis=1).mean() == total / B.
    return jnp.sum(partials[:, :, 0, 0]) / jnp.float32(B)


def bce_with_weight_ref(predict, target, alpha=ALPHA):
    predict = predict.astype(jnp.float32)
    target = target.astype(jnp.float32)
    loss = -((1.0 - alpha) * target * jnp.log(predict + EPS)
             + alpha * (1.0 - target) * jnp.log(1.0 - predict + EPS))
    return loss.sum(axis=1).mean()


if __name__ == "__main__":
    key = jax.random.PRNGKey(0)
    k1, k2, k3, k4 = jax.random.split(key, 4)

    # Small shape consistent with the module: (batch, features).
    B, D = 8, 256
    # predict is a probability in (0, 1); target is a (soft) binary label.
    predict = jax.nn.sigmoid(jax.random.normal(k1, (B, D), dtype=jnp.float32))
    target = jax.random.uniform(k2, (B, D), dtype=jnp.float32)

    out = jax.block_until_ready(bce_with_weight(predict, target))
    ref = bce_with_weight_ref(predict, target)
    assert jnp.allclose(out, ref, rtol=1e-5, atol=1e-5), (out, ref)

    # Non-divisible shape exercising the loss-neutral padding path.
    B2, D2 = 10, 300
    predict2 = jax.nn.sigmoid(jax.random.normal(k3, (B2, D2), dtype=jnp.float32))
    target2 = jax.random.uniform(k4, (B2, D2), dtype=jnp.float32)
    out2 = jax.block_until_ready(bce_with_weight(predict2, target2))
    ref2 = bce_with_weight_ref(predict2, target2)
    assert jnp.allclose(out2, ref2, rtol=1e-5, atol=1e-5), (out2, ref2)

    print("KERNEL_OK")
</pallas_src>

<mosaic_0001>
module attributes {stable_mosaic.version = 11 : i64} {
  func.func @_bce_weight_kernel(%arg0: i32, %arg1: i32, %arg2: i32, %arg3: memref<8x256xf32, #tpu.memory_space<vmem>>, %arg4: memref<8x256xf32, #tpu.memory_space<vmem>>, %arg5: memref<1x1x8x128xf32, #tpu.memory_space<vmem>>, %arg6: memref<8x256xf32, #tpu.memory_space<vmem>>) attributes {dimension_semantics = [#tpu.dimension_semantics<parallel>, #tpu.dimension_semantics<parallel>, #tpu.dimension_semantics<arbitrary>], iteration_bounds = array<i64: 1, 1, 1>, scalar_prefetch = 0 : i64, scratch_operands = 1 : i64, tpu.core_type = #tpu.core_type<tc>, window_params = [{transform_indices = @transform_0, window_bounds = array<i64: 8, 256>}, {transform_indices = @transform_1, window_bounds = array<i64: 8, 256>}, {transform_indices = @transform_2, window_bounds = array<i64: 1, 1, 8, 128>}]} {
    %c0_i32 = arith.constant 0 : i32
    %0 = arith.cmpi eq, %arg2, %c0_i32 : i32
    %1 = arith.extui %0 : i1 to i32
    %c0_i32_0 = arith.constant 0 : i32
    %2 = arith.cmpi ne, %1, %c0_i32_0 : i32
    scf.if %2 {
      %cst_15 = arith.constant 0.000000e+00 : f32
      %28 = vector.broadcast %cst_15 : f32 to vector<8x256xf32>
      %c0_16 = arith.constant 0 : index
      %c0_17 = arith.constant 0 : index
      %29 = vector.load %arg6[%c0_16, %c0_17] : memref<8x256xf32, #tpu.memory_space<vmem>>, vector<8x256xf32>
      tpu.vector_store %arg6[%c0_16, %c0_17], %28 {strides = array<i32>} : memref<8x256xf32, #tpu.memory_space<vmem>>, vector<8x256xf32>,
    } else {
    }
    %c0 = arith.constant 0 : index
    %c0_1 = arith.constant 0 : index
    %3 = vector.load %arg3[%c0, %c0_1] : memref<8x256xf32, #tpu.memory_space<vmem>>, vector<8x256xf32>
    %c0_2 = arith.constant 0 : index
    %c0_3 = arith.constant 0 : index
    %4 = vector.load %arg4[%c0_2, %c0_3] : memref<8x256xf32, #tpu.memory_space<vmem>>, vector<8x256xf32>
    %cst = arith.constant 9.99999974E-6 : f32
    %5 = vector.broadcast %cst : f32 to vector<8x256xf32>
    %6 = arith.addf %3, %5 : vector<8x256xf32>
    %7 = math.log %6 : vector<8x256xf32>
    %8 = arith.mulf %4, %7 : vector<8x256xf32>
    %cst_4 = arith.constant -0.949999988 : f32
    %9 = vector.broadcast %cst_4 : f32 to vector<8x256xf32>
    %10 = arith.mulf %9, %8 : vector<8x256xf32>
    %cst_5 = arith.constant 1.000000e+00 : f32
    %11 = vector.broadcast %cst_5 : f32 to vector<8x256xf32>
    %12 = arith.subf %11, %4 : vector<8x256xf32>
    %cst_6 = arith.constant 1.000000e+00 : f32
    %13 = vector.broadcast %cst_6 : f32 to vector<8x256xf32>
    %14 = arith.subf %13, %3 : vector<8x256xf32>
    %cst_7 = arith.constant 9.99999974E-6 : f32
    %15 = vector.broadcast %cst_7 : f32 to vector<8x256xf32>
    %16 = arith.addf %14, %15 : vector<8x256xf32>
    %17 = math.log %16 : vector<8x256xf32>
    %18 = arith.mulf %12, %17 : vector<8x256xf32>
    %cst_8 = arith.constant -5.000000e-02 : f32
    %19 = vector.broadcast %cst_8 : f32 to vector<8x256xf32>
    %20 = arith.mulf %19, %18 : vector<8x256xf32>
    %21 = arith.addf %10, %20 : vector<8x256xf32>
    %c0_9 = arith.constant 0 : index
    %c0_10 = arith.constant 0 : index
    %22 = vector.load %arg6[%c0_9, %c0_10] : memref<8x256xf32, #tpu.memory_space<vmem>>, vector<8x256xf32>
    %23 = arith.addf %22, %21 : vector<8x256xf32>
    %c0_11 = arith.constant 0 : index
    %c0_12 = arith.constant 0 : index
    %24 = vector.load %arg6[%c0_11, %c0_12] : memref<8x256xf32, #tpu.memory_space<vmem>>, vector<8x256xf32>
    tpu.vector_store %arg6[%c0_11, %c0_12], %23 {strides = array<i32>} : memref<8x256xf32, #tpu.memory_space<vmem>>, vector<8x256xf32>,
    %c0_i32_13 = arith.constant 0 : i32
    %25 = arith.cmpi eq, %arg2, %c0_i32_13 : i32
    %26 = arith.extui %25 : i1 to i32
    %c0_i32_14 = arith.constant 0 : i32
    %27 = arith.cmpi ne, %26, %c0_i32_14 : i32
    scf.if %27 {
      %c0_15 = arith.constant 0 : index
      %c0_16 = arith.constant 0 : index
      %28 = vector.load %arg6[%c0_15, %c0_16] : memref<8x256xf32, #tpu.memory_space<vmem>>, vector<8x256xf32>
      %29 = vector.shape_cast %28 : vector<8x256xf32> to vector<1x8x256xf32>
      %cst_17 = arith.constant dense<0.000000e+00> : vector<1xf32>
      %30 = vector.multi_reduction <add>, %29, %cst_17 [1, 2] : vector<1x8x256xf32> to vector<1xf32>
      %31 = vector.shape_cast %30 : vector<1xf32> to vector<1x1x1xf32>
      %32 = vector.extract %31[0, 0, 0] : f32 from vector<1x1x1xf32>
      %33 = vector.broadcast %32 : f32 to vector<1x1xf32>
      %34 = vector.shape_cast %33 : vector<1x1xf32> to vector<1x1xf32>
      %35 = vector.broadcast %34 : vector<1x1xf32> to vector<8x128xf32>
      %c0_18 = arith.constant 0 : index
      %c0_19 = arith.constant 0 : index
      %c0_20 = arith.constant 0 : index
      %c0_21 = arith.constant 0 : index
      %36 = vector.load %arg5[%c0_18, %c0_19, %c0_20, %c0_21] : memref<1x1x8x128xf32, #tpu.memory_space<vmem>>, vector<1x1x8x128xf32>
      %37 = vector.shape_cast %36 : vector<1x1x8x128xf32> to vector<8x128xf32>
      %38 = vector.shape_cast %35 : vector<8x128xf32> to vector<1x1x8x128xf32>
      tpu.vector_store %arg5[%c0_18, %c0_19, %c0_20, %c0_21], %38 {strides = array<i32>} : memref<1x1x8x128xf32, #tpu.memory_space<vmem>>, vector<1x1x8x128xf32>,
    } else {
    }
    return
  }
  func.func @transform_0(%arg0: i32, %arg1: i32, %arg2: i32) -> (i32, i32) {
    %c1_i32 = arith.constant 1 : i32
    %0 = arith.muli %arg1, %c1_i32 : i32
    %1 = arith.addi %0, %arg2 : i32
    %c0_i32 = arith.constant 0 : i32
    return %arg0, %1 : i32, i32
  }
  func.func @transform_1(%arg0: i32, %arg1: i32, %arg2: i32) -> (i32, i32) {
    %c1_i32 = arith.constant 1 : i32
    %0 = arith.muli %arg1, %c1_i32 : i32
    %1 = arith.addi %0, %arg2 : i32
    %c0_i32 = arith.constant 0 : i32
    return %arg0, %1 : i32, i32
  }
  func.func @transform_2(%arg0: i32, %arg1: i32, %arg2: i32) -> (i32, i32, i32, i32) {
    %c0_i32 = arith.constant 0 : i32
    %c0_i32_0 = arith.constant 0 : i32
    %c0_i32_1 = arith.constant 0 : i32
    return %arg0, %arg1, %c0_i32, %c0_i32_0 : i32, i32, i32, i32
  }
}

</mosaic_0001>

<llo_original>
// kernel: tpu_custom_call.1
$region0: #{tpu_custom_call.1}
  #allocation0 [shape = 'u32[]', space=smem, size = 0x4, offset = 0x4, fixed_abs, tag = 'smem constant byte address 0x4 - core index']
  #allocation1 [shape = 'u32[144,128]{1,0:T(1,128)}', space=vmem, size = 0x12000, scoped, tag = 'internal scratch']
  #allocation2 [shape = 'f32[8,256]{1,0:T(8,128)}', space=vmem, size = 0x2000, scoped, tag = 'scratch operand']
  %s0 = inlined_call_operand.hbm [shape: f32[8,256], index: 0, kind: input, shape index: {}]
  %s1 = inlined_call_operand.hbm [shape: f32[8,256], index: 1, kind: input, shape index: {}]
  %s2 = inlined_call_operand.hbm [shape: f32[1,1,8,128], index: 2, kind: output, shape index: {}]
  %s3 = sld [smem:[#allocation0]]
  $region34: #{tpu_custom_call.1} parent=0
    _
  %s5 = ssub.s32 1, %s3
  %s6 = scalar_select 0, %s5, %s3
  $region1: #{tpu_custom_call.1} parent=0
    #allocation3 [shape = 'u8[8192]{0}', space=vmem, size = 0x2000, scoped, tag = 'input window, operand 0, single buffered']
    #allocation4 [shape = 's32[1]{0}', space=sflag, size = 0x4, scoped, tag = 'scoped memory for tpu_custom_call.1']
    #allocation5 [shape = 's32[1]{0}', space=sflag, size = 0x4, scoped, tag = 'scoped memory for tpu_custom_call.1']
    #allocation6 [shape = 'u8[8192]{0}', space=vmem, size = 0x2000, scoped, tag = 'input window, operand 1, single buffered']
    #allocation7 [shape = 's32[1]{0}', space=sflag, size = 0x4, scoped, tag = 'scoped memory for tpu_custom_call.1']
    #allocation8 [shape = 'u8[4096]{0}', space=vmem, size = 0x1000, scoped, tag = 'output window, operand 0, single buffered']
    %7 = vsyncpa [#allocation4], 0
    %8 = vsyncpa [#allocation7], 0
    %9 = vsyncpa [#allocation5], 0
    // Predicated region
    $region2: #{tpu_custom_call.1} parent=1 // pred_check
      _
    $region3: #{tpu_custom_call.1} parent=1 // pred_check_branch
      %11 = sbr.rel (0) target = $region5
    $region4: #{tpu_custom_call.1} parent=1 // pred_region
      %s12 = sadd.s32 0, 0
      %s13 = smul.u32 2, %s12
      %s15 = ssub.s32 256, 256
      %16 = vsyncadd [#allocation4], %s15
      %s17 = smul.addr %s13, 128
      %s18 = scalar_lea.hbm %s0, %s17
      %s20 = sshll.u32 [#allocation3], 4
      %s21 = int_to_ptr.vmem [resolvable:$true] %s20
      %23 = dma.hbm_to_vmem [thread:$0]  %s18, 256, %s21, [#allocation4]
    $region5: #{tpu_custom_call.1} parent=1 // pred_fallthru
      _
    // Predicated region
    $region6: #{tpu_custom_call.1} parent=1 // pred_check
      _
    $region7: #{tpu_custom_call.1} parent=1 // pred_check_branch
      %25 = sbr.rel (0) target = $region9
    $region8: #{tpu_custom_call.1} parent=1 // pred_region
      %s26 = sadd.s32 0, 0
      %s27 = smul.u32 2, %s26
      %s29 = ssub.s32 256, 256
      %30 = vsyncadd [#allocation7], %s29
      %s31 = smul.addr %s27, 128
      %s32 = scalar_lea.hbm %s1, %s31
      %s34 = sshll.u32 [#allocation6], 4
      %s35 = int_to_ptr.vmem [resolvable:$true] %s34
      %37 = dma.hbm_to_vmem [thread:$0]  %s32, 256, %s35, [#allocation7]
    $region9: #{tpu_custom_call.1} parent=1 // pred_fallthru
      _
    // Predicated region
    $region10: #{tpu_custom_call.1} parent=1 // pred_check
      _
    $region11: #{tpu_custom_call.1} parent=1 // pred_check_branch
      %39 = sbr.rel (0) target = $region13
    $region12: #{tpu_custom_call.1} parent=1 // pred_region
      %40 = dma.done [#allocation4], 256
    $region13: #{tpu_custom_call.1} parent=1 // pred_fallthru
      _
    // Predicated region
    $region14: #{tpu_custom_call.1} parent=1 // pred_check
      _
    $region15: #{tpu_custom_call.1} parent=1 // pred_check_branch
      %42 = sbr.rel (0) target = $region17
    $region16: #{tpu_custom_call.1} parent=1 // pred_region
      %43 = dma.done [#allocation7], 256
    $region17: #{tpu_custom_call.1} parent=1 // pred_fallthru
      _
    %s44 = sadd.s32 0, 0
    %s45 = smul.u32 2, %s44
    %s46 = sadd.s32 0, 0
    %s47 = smul.u32 2, %s46
    %p48 = scmp.eq.s32.totalorder 0, 0
    // Predicated region
    $region18: #{tpu_custom_call.1} parent=1 // pred_check
      %p49 = pneg %p48
    $region19: #{tpu_custom_call.1} parent=1 // pred_check_branch
      %51 = sbr.rel (%p49) target = $region21
    $region20: #{tpu_custom_call.1} parent=1 // pred_region
      %52 = vst [vmem:[#allocation2] sm:$0xff] 0.0
      %53 = vst [vmem:[#allocation2 + $0x8] sm:$0xff] 0.0
    $region21: #{tpu_custom_call.1} parent=1 // pred_fallthru
      _
    %v54 = vld [vmem:[#allocation3] sm:$0xff]
    %v55 = vld [vmem:[#allocation3 + $0x8] sm:$0xff]
    %v56 = vld [vmem:[#allocation6] sm:$0xff]
    %v57 = vld [vmem:[#allocation6 + $0x8] sm:$0xff]
    %v58 = vadd.f32 %v54, 1e-05
    %v59 = vadd.f32 %v55, 1e-05
    %v60 = vlog2.pop %v58
    %v61 = vmul.f32 %v60, 0.6931472
    %v62 = vlog2.pop %v59
    %v63 = vmul.f32 %v62, 0.6931472
    %v64 = vmul.f32 %v56, %v61
    %v65 = vmul.f32 %v57, %v63
    %v66 = vmul.f32 %v64, -0.95
    %v67 = vmul.f32 %v65, -0.95
    %v68 = vsub.f32 1.0, %v56
    %v69 = vsub.f32 1.0, %v57
    %v70 = vsub.f32 1.0, %v54
    %v71 = vsub.f32 1.0, %v55
    %v72 = vadd.f32 %v70, 1e-05
    %v73 = vadd.f32 %v71, 1e-05
    %v74 = vlog2.pop %v72
    %v75 = vmul.f32 %v74, 0.6931472
    %v76 = vlog2.pop %v73
    %v77 = vmul.f32 %v76, 0.6931472
    %v78 = vmul.f32 %v68, %v75
    %v79 = vmul.f32 %v69, %v77
    %v80 = vmul.f32 %v78, -0.05
    %v81 = vmul.f32 %v79, -0.05
    %v82 = vadd.f32 %v66, %v80
    %v83 = vadd.f32 %v67, %v81
    %v84 = vld [vmem:[#allocation2] sm:$0xff]
    %v85 = vld [vmem:[#allocation2 + $0x8] sm:$0xff]
    %v86 = vadd.f32 %v84, %v82
    %v87 = vadd.f32 %v85, %v83
    %88 = vst [vmem:[#allocation2] sm:$0xff] %v86
    %89 = vst [vmem:[#allocation2 + $0x8] sm:$0xff] %v87
    // Predicated region
    $region22: #{tpu_custom_call.1} parent=1 // pred_check
      %p90 = pneg %p48
    $region23: #{tpu_custom_call.1} parent=1 // pred_check_branch
      %92 = sbr.rel (%p90) target = $region25
    $region24: #{tpu_custom_call.1} parent=1 // pred_region
      %v93 = vld [vmem:[#allocation2] sm:$0xff]
      %v94 = vld [vmem:[#allocation2 + $0x8] sm:$0xff]
      %v95 = vadd.f32 %v93, %v94
      %96 = vadd.xlane.f32.xlu0 %v95
      %v97 = vpop.xlane.xlu0 %96
      %v98 = vrot.slane %v97, 4
      %v99 = vadd.f32 %v97, %v98
      %v100 = vrot.slane %v99, 2
      %v101 = vadd.f32 %v99, %v100
      %v102 = vrot.slane %v101, 1
      %v103 = vadd.f32 %v101, %v102
      %s104 = vtos %v103
      %v105 = vstv %s104
      %106 = vst [vmem:[#allocation8] sm:$0xff] %v105
    $region25: #{tpu_custom_call.1} parent=1 // pred_fallthru
      _
    // Predicated region
    $region26: #{tpu_custom_call.1} parent=1 // pred_check
      _
    $region27: #{tpu_custom_call.1} parent=1 // pred_check_branch
      %108 = sbr.rel (0) target = $region29
    $region28: #{tpu_custom_call.1} parent=1 // pred_region
      %s110 = ssub.s32 128, 128
      %111 = vsyncadd [#allocation5], %s110
      %s113 = sshll.u32 [#allocation8], 4
      %s114 = int_to_ptr.vmem [resolvable:$true] %s113
      %116 = dma.vmem_to_hbm [thread:$0]  %s114, 128, %s2, [#allocation5]
    $region29: #{tpu_custom_call.1} parent=1 // pred_fallthru
      _
    // Predicated region
    $region30: #{tpu_custom_call.1} parent=1 // pred_check
      _
    $region31: #{tpu_custom_call.1} parent=1 // pred_check_branch
      %118 = sbr.rel (0) target = $region33
    $region32: #{tpu_custom_call.1} parent=1 // pred_region
      %119 = dma.done [#allocation5], 128
    $region33: #{tpu_custom_call.1} parent=1 // pred_fallthru
      _
    %120 = vsyncpa [#allocation4], 1
    %121 = vsyncpa [#allocation7], 1
    %122 = vsyncpa [#allocation5], 1

</llo_original>
